<compile_context>
chip_gen: v7x
topology: tpu7x:2x2x1
jax: 0.10.0
libtpu: 0.0.40
codegen_flags: <defaults>
</compile_context>

<pallas_src>
import functools

import jax
import jax.numpy as jnp
from jax.experimental import pallas as pl
from jax.experimental.pallas import tpu as pltpu


def _se_kernel(x_ref, w1t_ref, b1_ref, w2t_ref, b2_ref, o_ref, *, inv_hw):
    # x_ref: (Bt, C, HW_pad) block of Bt batch elements.
    x = x_ref[...].astype(jnp.float32)                    # (Bt, C, HWp)

    # Global average pool (AdaptiveAvgPool2d(1)).  Padded lanes are zero, so
    # divide by the true H*W, not the padded width.
    pooled = jnp.sum(x, axis=-1) * inv_hw                 # (Bt, C)

    # 1x1 conv == dense.  Weights arrive pre-transposed: w1t (C, Cr), w2t (Cr, C).
    h = jnp.dot(pooled, w1t_ref[...],
                preferred_element_type=jnp.float32) + b1_ref[...]   # (Bt, Cr)
    h = jnp.maximum(h, 0.0)                               # ReLU
    s = jnp.dot(h, w2t_ref[...],
                preferred_element_type=jnp.float32) + b2_ref[...]   # (Bt, C)

    # Hardsigmoid: clamp((s + 3) / 6, 0, 1)
    scale = jnp.clip((s + 3.0) * (1.0 / 6.0), 0.0, 1.0)   # (Bt, C)

    # Rescale and store (lane-dense, unmasked writeback).
    o_ref[...] = (x * scale[:, :, None]).astype(o_ref.dtype)


def squeeze_excite(x, w1, b1, w2, b2, *, vmem_block_budget=16 * 2**20):
    """x: (N, C, H, W). w1: (Cr, C), b1: (1, Cr), w2: (C, Cr), b2: (1, C)."""
    N, C, H, W = x.shape
    HW = H * W
    Cr = w1.shape[0]
    itemsize = jnp.dtype(x.dtype).itemsize

    # Lane-dense spatial axis: pad H*W up to a multiple of 128 with zeros.
    hw_pad = pl.cdiv(HW, 128) * 128
    x2 = x.reshape(N, C, HW)
    if hw_pad != HW:
        x2 = jnp.pad(x2, ((0, 0), (0, 0), (0, hw_pad - HW)))

    # Auto-size the batch block Bt so (in + out) x double-buffer fits the VMEM
    # budget (conservative enough for v7x's 64 MiB / 32 MiB scoped default).
    per_elem_bytes = 2 * 2 * C * hw_pad * itemsize
    bt = max(1, int(vmem_block_budget // per_elem_bytes))
    bt = min(bt, N)
    if N >= 2:
        # Keep at least 2 grid steps so the "parallel" batch axis can shard
        # across both TensorCores on v7x megacore parts.
        bt = min(bt, pl.cdiv(N, 2))
    n_pad = pl.cdiv(N, bt) * bt
    if n_pad != N:
        x2 = jnp.pad(x2, ((0, n_pad - N), (0, 0), (0, 0)))

    # TODO(synk): for very large C*HW (early-layer SE, e.g. C=64, HW=112*112)
    # where even a Bt=1 block exceeds the VMEM budget, fall back to an
    # HW-tiled two-phase structure (pool pass, then rescale pass).

    # Pre-transpose the grid-invariant weights once, outside the kernel.
    w1t = w1.T                                             # (C, Cr)
    w2t = w2.T                                             # (Cr, C)

    kernel = functools.partial(_se_kernel, inv_hw=1.0 / HW)

    out = pl.pallas_call(
        kernel,
        out_shape=jax.ShapeDtypeStruct((n_pad, C, hw_pad), x.dtype),
        grid_spec=pltpu.PrefetchScalarGridSpec(
            num_scalar_prefetch=0,
            grid=(n_pad // bt,),
            in_specs=[
                pl.BlockSpec((bt, C, hw_pad), lambda n: (n, 0, 0)),
                pl.BlockSpec((C, Cr), lambda n: (0, 0)),
                pl.BlockSpec((1, Cr), lambda n: (0, 0)),
                pl.BlockSpec((Cr, C), lambda n: (0, 0)),
                pl.BlockSpec((1, C), lambda n: (0, 0)),
            ],
            out_specs=pl.BlockSpec((bt, C, hw_pad), lambda n: (n, 0, 0)),
        ),
        compiler_params=pltpu.CompilerParams(
            dimension_semantics=("parallel",),
            vmem_limit_bytes=48 * 2**20,
        ),
    )(x2, w1t, b1, w2t, b2)

    return out[:N, :, :HW].reshape(N, C, H, W)


def reference(x, w1, b1, w2, b2):
    pooled = jnp.mean(x, axis=(2, 3))                       # (N, C)
    h = jnp.maximum(pooled @ w1.T + b1, 0.0)                # (N, Cr)
    s = h @ w2.T + b2                                       # (N, C)
    scale = jnp.clip((s + 3.0) / 6.0, 0.0, 1.0)
    return x * scale[:, :, None, None]


if __name__ == "__main__":
    key = jax.random.PRNGKey(0)
    N, C, H, W = 2, 4, 16, 16
    reduction = 4
    Cr = C // reduction

    k_x, k_w1, k_b1, k_w2, k_b2 = jax.random.split(key, 5)
    x = jax.random.normal(k_x, (N, C, H, W), dtype=jnp.float32)
    # Conv2d 1x1 == dense weight of shape (out, in)
    w1 = 0.1 * jax.random.normal(k_w1, (Cr, C), dtype=jnp.float32)
    b1 = 0.1 * jax.random.normal(k_b1, (1, Cr), dtype=jnp.float32)
    w2 = 0.1 * jax.random.normal(k_w2, (C, Cr), dtype=jnp.float32)
    b2 = 0.1 * jax.random.normal(k_b2, (1, C), dtype=jnp.float32)

    out = squeeze_excite(x, w1, b1, w2, b2)
    jax.block_until_ready(out)

    ref = reference(x, w1, b1, w2, b2)
    assert jnp.allclose(out, ref, atol=1e-5, rtol=1e-5), "mismatch vs reference"
    print("KERNEL_OK")
</pallas_src>

<mosaic_0001>
module attributes {stable_mosaic.version = 11 : i64} {
  func.func @_se_kernel(%arg0: i32, %arg1: memref<1x4x256xf32, #tpu.memory_space<vmem>>, %arg2: memref<4x1xf32, #tpu.memory_space<vmem>>, %arg3: memref<1x1xf32, #tpu.memory_space<vmem>>, %arg4: memref<1x4xf32, #tpu.memory_space<vmem>>, %arg5: memref<1x4xf32, #tpu.memory_space<vmem>>, %arg6: memref<1x4x256xf32, #tpu.memory_space<vmem>>) attributes {dimension_semantics = [#tpu.dimension_semantics<parallel>], iteration_bounds = array<i64: 2>, scalar_prefetch = 0 : i64, scratch_operands = 0 : i64, tpu.core_type = #tpu.core_type<tc>, window_params = [{transform_indices = @transform_0, window_bounds = array<i64: 1, 4, 256>}, {pipeline_mode = #tpu.pipeline_mode<synchronous>, transform_indices = @transform_1, window_bounds = array<i64: 4, 1>}, {pipeline_mode = #tpu.pipeline_mode<synchronous>, transform_indices = @transform_2, window_bounds = array<i64: 1, 1>}, {pipeline_mode = #tpu.pipeline_mode<synchronous>, transform_indices = @transform_3, window_bounds = array<i64: 1, 4>}, {pipeline_mode = #tpu.pipeline_mode<synchronous>, transform_indices = @transform_4, window_bounds = array<i64: 1, 4>}, {transform_indices = @transform_5, window_bounds = array<i64: 1, 4, 256>}]} {
    %c0 = arith.constant 0 : index
    %c0_0 = arith.constant 0 : index
    %c0_1 = arith.constant 0 : index
    %0 = vector.load %arg1[%c0, %c0_0, %c0_1] : memref<1x4x256xf32, #tpu.memory_space<vmem>>, vector<1x4x256xf32>
    %cst = arith.constant dense<0.000000e+00> : vector<1x4xf32>
    %1 = vector.multi_reduction <add>, %0, %cst [2] : vector<1x4x256xf32> to vector<1x4xf32>
    %cst_2 = arith.constant 3.906250e-03 : f32
    %2 = vector.broadcast %cst_2 : f32 to vector<1x4xf32>
    %3 = arith.mulf %1, %2 : vector<1x4xf32>
    %c0_3 = arith.constant 0 : index
    %c0_4 = arith.constant 0 : index
    %4 = vector.load %arg2[%c0_3, %c0_4] : memref<4x1xf32, #tpu.memory_space<vmem>>, vector<4x1xf32>
    %cst_5 = arith.constant dense<0.000000e+00> : vector<1x1xf32>
    %5 = tpu.matmul %3, %4, %cst_5 {dimension_numbers = #tpu.dot_dimension_numbers<[1], [0], [0], [1], [0, 0, 1, 1], [], []>} : vector<1x4xf32>, vector<4x1xf32>, vector<1x1xf32> -> vector<1x1xf32>
    %c0_6 = arith.constant 0 : index
    %c0_7 = arith.constant 0 : index
    %6 = vector.load %arg3[%c0_6, %c0_7] : memref<1x1xf32, #tpu.memory_space<vmem>>, vector<1x1xf32>
    %7 = arith.addf %5, %6 : vector<1x1xf32>
    %cst_8 = arith.constant 0.000000e+00 : f32
    %8 = vector.broadcast %cst_8 : f32 to vector<1x1xf32>
    %9 = arith.maximumf %7, %8 : vector<1x1xf32>
    %c0_9 = arith.constant 0 : index
    %c0_10 = arith.constant 0 : index
    %10 = vector.load %arg4[%c0_9, %c0_10] : memref<1x4xf32, #tpu.memory_space<vmem>>, vector<1x4xf32>
    %cst_11 = arith.constant dense<0.000000e+00> : vector<1x4xf32>
    %11 = tpu.matmul %9, %10, %cst_11 {dimension_numbers = #tpu.dot_dimension_numbers<[1], [0], [0], [1], [0, 0, 1, 1], [], []>} : vector<1x1xf32>, vector<1x4xf32>, vector<1x4xf32> -> vector<1x4xf32>
    %c0_12 = arith.constant 0 : index
    %c0_13 = arith.constant 0 : index
    %12 = vector.load %arg5[%c0_12, %c0_13] : memref<1x4xf32, #tpu.memory_space<vmem>>, vector<1x4xf32>
    %13 = arith.addf %11, %12 : vector<1x4xf32>
    %cst_14 = arith.constant 3.000000e+00 : f32
    %14 = vector.broadcast %cst_14 : f32 to vector<1x4xf32>
    %15 = arith.addf %13, %14 : vector<1x4xf32>
    %cst_15 = arith.constant 0.166666672 : f32
    %16 = vector.broadcast %cst_15 : f32 to vector<1x4xf32>
    %17 = arith.mulf %15, %16 : vector<1x4xf32>
    %cst_16 = arith.constant 0.000000e+00 : f32
    %cst_17 = arith.constant 1.000000e+00 : f32
    %18 = vector.broadcast %cst_16 : f32 to vector<1x4xf32>
    %19 = arith.maximumf %18, %17 : vector<1x4xf32>
    %20 = vector.broadcast %cst_17 : f32 to vector<1x4xf32>
    %21 = arith.minimumf %20, %19 : vector<1x4xf32>
    %22 = vector.shape_cast %21 : vector<1x4xf32> to vector<1x4x1xf32>
    %23 = vector.broadcast %22 : vector<1x4x1xf32> to vector<1x4x256xf32>
    %24 = arith.mulf %0, %23 : vector<1x4x256xf32>
    %c0_18 = arith.constant 0 : index
    %c0_19 = arith.constant 0 : index
    %c0_20 = arith.constant 0 : index
    %25 = vector.load %arg6[%c0_18, %c0_19, %c0_20] : memref<1x4x256xf32, #tpu.memory_space<vmem>>, vector<1x4x256xf32>
    tpu.vector_store %arg6[%c0_18, %c0_19, %c0_20], %24 {strides = array<i32>} : memref<1x4x256xf32, #tpu.memory_space<vmem>>, vector<1x4x256xf32>,
    return
  }
  func.func @transform_0(%arg0: i32) -> (i32, i32, i32) {
    %c0_i32 = arith.constant 0 : i32
    %c0_i32_0 = arith.constant 0 : i32
    %c0_i32_1 = arith.constant 0 : i32
    return %arg0, %c0_i32, %c0_i32_0 : i32, i32, i32
  }
  func.func @transform_1(%arg0: i32) -> (i32, i32) {
    %c0_i32 = arith.constant 0 : i32
    %c0_i32_0 = arith.constant 0 : i32
    %c0_i32_1 = arith.constant 0 : i32
    return %c0_i32, %c0_i32_0 : i32, i32
  }
  func.func @transform_2(%arg0: i32) -> (i32, i32) {
    %c0_i32 = arith.constant 0 : i32
    %c0_i32_0 = arith.constant 0 : i32
    %c0_i32_1 = arith.constant 0 : i32
    return %c0_i32, %c0_i32_0 : i32, i32
  }
  func.func @transform_3(%arg0: i32) -> (i32, i32) {
    %c0_i32 = arith.constant 0 : i32
    %c0_i32_0 = arith.constant 0 : i32
    %c0_i32_1 = arith.constant 0 : i32
    return %c0_i32, %c0_i32_0 : i32, i32
  }
  func.func @transform_4(%arg0: i32) -> (i32, i32) {
    %c0_i32 = arith.constant 0 : i32
    %c0_i32_0 = arith.constant 0 : i32
    %c0_i32_1 = arith.constant 0 : i32
    return %c0_i32, %c0_i32_0 : i32, i32
  }
  func.func @transform_5(%arg0: i32) -> (i32, i32, i32) {
    %c0_i32 = arith.constant 0 : i32
    %c0_i32_0 = arith.constant 0 : i32
    %c0_i32_1 = arith.constant 0 : i32
    return %arg0, %c0_i32, %c0_i32_0 : i32, i32, i32
  }
}

</mosaic_0001>

<llo_original>
// kernel: tpu_custom_call.1
$region0: #{tpu_custom_call.1}
  #allocation0 [shape = 'u32[]', space=smem, size = 0x4, offset = 0x4, fixed_abs, tag = 'smem constant byte address 0x4 - core index']
  #allocation1 [shape = 'u32[144,128]{1,0:T(1,128)}', space=vmem, size = 0x12000, scoped, tag = 'internal scratch']
  #allocation2 [shape = 'f32[1,1]{1,0:T(1,128)S(1)}', space=vmem, size = 0x200, scoped, tag = 'scoped memory for tpu_custom_call.1']
  %s0 = inlined_call_operand.hbm [shape: f32[2,4,256], index: 0, kind: input, shape index: {}]
  %s1 = inlined_call_operand.vmem [shape: f32[4,1], index: 1, kind: input, shape index: {}]
  %s2 = inlined_call_operand.<no memory space> [shape: f32[1,1], index: 2, kind: input, shape index: {}]
  %s3 = inlined_call_operand.vmem [shape: f32[1,4], index: 3, kind: input, shape index: {}]
  %s4 = inlined_call_operand.vmem [shape: f32[1,4], index: 4, kind: input, shape index: {}]
  %s5 = inlined_call_operand.hbm [shape: f32[2,4,256], index: 5, kind: output, shape index: {}]
  %s6 = sld [smem:[#allocation0]]
  $region57: #{tpu_custom_call.1} parent=0
    _
  %s8 = ssub.s32 1, %s6
  %s9 = scalar_select 0, %s8, %s6
  %v10 = vstv %s2
  %11 = vst [vmem:[#allocation2] sm:$0x1] %v10
  $region1: #{tpu_custom_call.1} parent=0
    #allocation3 [shape = 'u8[8192]{0}', space=vmem, size = 0x2000, scoped, tag = 'input window, operand 0']
    #allocation4 [shape = 's32[2]{0}', space=sflag, size = 0x8, scoped, tag = 'scoped memory for tpu_custom_call.1']
    #allocation5 [shape = 's32[2]{0}', space=sflag, size = 0x8, scoped, tag = 'scoped memory for tpu_custom_call.1']
    #allocation6 [shape = 'u8[8192]{0}', space=vmem, size = 0x2000, scoped, tag = 'output window, operand 0']
    %12 = vsyncpa [#allocation4], 0
    %s13 = scalar_lea.sflag [#allocation4], 1
    %14 = vsyncpa %s13, 0
    %15 = vsyncpa [#allocation5], 0
    %s16 = scalar_lea.sflag [#allocation5], 1
    %17 = vsyncpa %s16, 0
    loop: start=0, step=1, limit=4
    $region2: #{tpu_custom_call.1} parent=1 // loop_pre_header
      _
    $region3: #{tpu_custom_call.1} parent=1 // loop_header
      %s19 = sphi 0, %s23
      %p20 = scmp.ge.s32.totalorder %s19, 4
      %s29 = sphi 0, %s31
      %s32 = sphi 0, %s29
      %s33 = sphi 0, %s32
      %s49 = sphi 0, %s33
      %s53 = sphi 0, %s53
      %s55 = sphi 0, %s53
      %s56 = sphi 0, %s55
      %s70 = sphi 0, %s56
      %s74 = sphi 0, %s74
      %s76 = sphi 0, %s74
      %s77 = sphi 0, %s76
      %s91 = sphi 0, %s77
      %s95 = sphi 0, %s95
      %s97 = sphi 0, %s95
      %s98 = sphi 0, %s97
      %s112 = sphi 0, %s98
      %s116 = sphi 0, %s116
      %s118 = sphi 0, %s116
      %s119 = sphi 0, %s118
      %s133 = sphi 0, %s119
      %s139 = sphi 0, %s141
      %s142 = sphi 0, %s139
      %s143 = sphi 0, %s142
      %s159 = sphi 0, %s143
    $region4: #{tpu_custom_call.1} parent=1 // loop_header_branch
      %22 = sbr.rel (%p20) target = $region8
    $region5: #{tpu_custom_call.1} parent=1 // loop_body
      %s24 = ssub.s32 %s19, 1
      %s25 = ssub.s32 %s19, 2
      %s26 = sadd.s32 %s19, 1
      %s27 = ssub.s32 %s19, %s26
      %p28 = scmp.eq.s32.totalorder %s27, 0
      %s30 = sadd.s32 %s29, 1
      %s31 = scalar_select %p28, %s29, %s30
      %p34 = pneg %p28
      %p35 = scmp.eq.s32.totalorder %s19, 1
      %p36 = por %p34, %p35
      %p37 = scmp.ne.s32.totalorder %s29, %s32
      %p38 = scmp.eq.s32.totalorder %s19, 0
      %p39 = por %p37, %p38
      %p40 = scmp.ne.s32.totalorder %s29, %s32
      %p41 = scmp.eq.s32.totalorder %s24, 1
      %p42 = por %p40, %p41
      %p43 = scmp.ne.s32.totalorder %s32, %s33
      %p44 = scmp.eq.s32.totalorder %s24, 0
      %p45 = por %p43, %p44
      %p46 = scmp.ne.s32.totalorder %s32, %s33
      %p47 = scmp.eq.s32.totalorder %s25, 1
      %p48 = por %p46, %p47
      %p50 = scmp.ne.s32.totalorder %s33, %s49
      %p51 = scmp.eq.s32.totalorder %s25, 0
      %p52 = por %p50, %p51
      %s54 = sadd.s32 %s53, 1
      %p57 = scmp.eq.s32.totalorder %s19, 1
      %p58 = scmp.ne.s32.totalorder %s53, %s55
      %p59 = scmp.eq.s32.totalorder %s19, 0
      %p60 = por %p58, %p59
      %p61 = scmp.ne.s32.totalorder %s53, %s55
      %p62 = scmp.eq.s32.totalorder %s24, 1
      %p63 = por %p61, %p62
      %p64 = scmp.ne.s32.totalorder %s55, %s56
      %p65 = scmp.eq.s32.totalorder %s24, 0
      %p66 = por %p64, %p65
      %p67 = scmp.ne.s32.totalorder %s55, %s56
      %p68 = scmp.eq.s32.totalorder %s25, 1
      %p69 = por %p67, %p68
      %p71 = scmp.ne.s32.totalorder %s56, %s70
      %p72 = scmp.eq.s32.totalorder %s25, 0
      %p73 = por %p71, %p72
      %s75 = sadd.s32 %s74, 1
      %p78 = scmp.eq.s32.totalorder %s19, 1
      %p79 = scmp.ne.s32.totalorder %s74, %s76
      %p80 = scmp.eq.s32.totalorder %s19, 0
      %p81 = por %p79, %p80
      %p82 = scmp.ne.s32.totalorder %s74, %s76
      %p83 = scmp.eq.s32.totalorder %s24, 1
      %p84 = por %p82, %p83
      %p85 = scmp.ne.s32.totalorder %s76, %s77
      %p86 = scmp.eq.s32.totalorder %s24, 0
      %p87 = por %p85, %p86
      %p88 = scmp.ne.s32.totalorder %s76, %s77
      %p89 = scmp.eq.s32.totalorder %s25, 1
      %p90 = por %p88, %p89
      %p92 = scmp.ne.s32.totalorder %s77, %s91
      %p93 = scmp.eq.s32.totalorder %s25, 0
      %p94 = por %p92, %p93
      %s96 = sadd.s32 %s95, 1
      %p99 = scmp.eq.s32.totalorder %s19, 1
      %p100 = scmp.ne.s32.totalorder %s95, %s97
      %p101 = scmp.eq.s32.totalorder %s19, 0
      %p102 = por %p100, %p101
      %p103 = scmp.ne.s32.totalorder %s95, %s97
      %p104 = scmp.eq.s32.totalorder %s24, 1
      %p105 = por %p103, %p104
      %p106 = scmp.ne.s32.totalorder %s97, %s98
      %p107 = scmp.eq.s32.totalorder %s24, 0
      %p108 = por %p106, %p107
      %p109 = scmp.ne.s32.totalorder %s97, %s98
      %p110 = scmp.eq.s32.totalorder %s25, 1
      %p111 = por %p109, %p110
      %p113 = scmp.ne.s32.totalorder %s98, %s112
      %p114 = scmp.eq.s32.totalorder %s25, 0
      %p115 = por %p113, %p114
      %s117 = sadd.s32 %s116, 1
      %p120 = scmp.eq.s32.totalorder %s19, 1
      %p121 = scmp.ne.s32.totalorder %s116, %s118
      %p122 = scmp.eq.s32.totalorder %s19, 0
      %p123 = por %p121, %p122
      %p124 = scmp.ne.s32.totalorder %s116, %s118
      %p125 = scmp.eq.s32.totalorder %s24, 1
      %p126 = por %p124, %p125
      %p127 = scmp.ne.s32.totalorder %s118, %s119
      %p128 = scmp.eq.s32.totalorder %s24, 0
      %p129 = por %p127, %p128
      %p130 = scmp.ne.s32.totalorder %s118, %s119
      %p131 = scmp.eq.s32.totalorder %s25, 1
      %p132 = por %p130, %p131
      %p134 = scmp.ne.s32.totalorder %s119, %s133
      %p135 = scmp.eq.s32.totalorder %s25, 0
      %p136 = por %p134, %p135
      %s137 = ssub.s32 %s19, %s26
      %p138 = scmp.eq.s32.totalorder %s137, 0
      %s140 = sadd.s32 %s139, 1
      %s141 = scalar_select %p138, %s139, %s140
      %p144 = pneg %p138
      %p145 = scmp.eq.s32.totalorder %s19, 1
      %p146 = por %p144, %p145
      %p147 = scmp.ne.s32.totalorder %s139, %s142
      %p148 = scmp.eq.s32.totalorder %s19, 0
      %p149 = por %p147, %p148
      %p150 = scmp.ne.s32.totalorder %s139, %s142
      %p151 = scmp.eq.s32.totalorder %s24, 1
      %p152 = por %p150, %p151
      %p153 = scmp.ne.s32.totalorder %s142, %s143
      %p154 = scmp.eq.s32.totalorder %s24, 0
      %p155 = por %p153, %p154
      %p156 = scmp.ne.s32.totalorder %s142, %s143
      %p157 = scmp.eq.s32.totalorder %s25, 1
      %p158 = por %p156, %p157
      %p160 = scmp.ne.s32.totalorder %s143, %s159
      %p161 = scmp.eq.s32.totalorder %s25, 0
      %p162 = por %p160, %p161
      %p163 = scmp.le.s32.totalorder 1, %s19
      %p164 = scmp.lt.s32.totalorder %s19, 3
      %p165 = pnand %p163, %p164
      %p166 = pneg %p165
      // Predicated region
      $region9: #{tpu_custom_call.1} parent=5 // pred_check
        _
      $region10: #{tpu_custom_call.1} parent=5 // pred_check_branch
        %168 = sbr.rel (%p165) target = $region12
      $region11: #{tpu_custom_call.1} parent=5 // pred_region
        %s169 = ssub.s32 %s19, 1
        // Predicated region
        $region13: #{tpu_custom_call.1} parent=11 // pred_check
          %p170 = pneg %p66
        $region14: #{tpu_custom_call.1} parent=11 // pred_check_branch
          %172 = sbr.rel (%p170) target = $region16
        $region15: #{tpu_custom_call.1} parent=11 // pred_region
          _
        $region16: #{tpu_custom_call.1} parent=11 // pred_fallthru
          _
        // Predicated region
        $region17: #{tpu_custom_call.1} parent=11 // pred_check
          %p173 = pneg %p87
        $region18: #{tpu_custom_call.1} parent=11 // pred_check_branch
          %175 = sbr.rel (%p173) target = $region20
        $region19: #{tpu_custom_call.1} parent=11 // pred_region
          _
        $region20: #{tpu_custom_call.1} parent=11 // pred_fallthru
          _
        // Predicated region
        $region21: #{tpu_custom_call.1} parent=11 // pred_check
          %p176 = pneg %p108
        $region22: #{tpu_custom_call.1} parent=11 // pred_check_branch
          %178 = sbr.rel (%p176) target = $region24
        $region23: #{tpu_custom_call.1} parent=11 // pred_region
          _
        $region24: #{tpu_custom_call.1} parent=11 // pred_fallthru
          _
        // Predicated region
        $region25: #{tpu_custom_call.1} parent=11 // pred_check
          %p179 = pneg %p129
        $region26: #{tpu_custom_call.1} parent=11 // pred_check_branch
          %181 = sbr.rel (%p179) target = $region28
        $region27: #{tpu_custom_call.1} parent=11 // pred_region
          _
        $region28: #{tpu_custom_call.1} parent=11 // pred_fallthru
          _
      $region12: #{tpu_custom_call.1} parent=5 // pred_fallthru
        _
      %p182 = scmp.lt.s32.totalorder %s19, 2
      // Predicated region
      $region29: #{tpu_custom_call.1} parent=5 // pred_check
        %p183 = pneg %p182
      $region30: #{tpu_custom_call.1} parent=5 // pred_check_branch
        %185 = sbr.rel (%p183) target = $region32
      $region31: #{tpu_custom_call.1} parent=5 // pred_region
        // Predicated region
        $region33: #{tpu_custom_call.1} parent=31 // pred_check
          %p186 = pneg %p39
        $region34: #{tpu_custom_call.1} parent=31 // pred_check_branch
          %188 = sbr.rel (%p186) target = $region36
        $region35: #{tpu_custom_call.1} parent=31 // pred_region
          %s189 = sand.u32 %s29, 1
          %s190 = scalar_lea.sflag [#allocation4], %s189
          %s191 = sand.u32 %s29, 1
          %s192 = smul.addr %s191, 8
          %s193 = scalar_lea.vmem [#allocation3], %s192
          %s195 = ssub.s32 128, 128
          %196 = vsyncadd %s190, %s195
          %s197 = smul.addr %s19, 2
          %s198 = smul.addr %s197, 64
          %s199 = scalar_lea.hbm %s0, %s198
          %s201 = sshll.u32 %s193, 4
          %s202 = int_to_ptr.vmem [resolvable:$true] %s201
          %204 = dma.hbm_to_vmem [thread:$0]  %s199, 128, %s202, %s190
        $region36: #{tpu_custom_call.1} parent=31 // pred_fallthru
          _
      $region32: #{tpu_custom_call.1} parent=5 // pred_fallthru
        _
      %p205 = scmp.le.s32.totalorder 1, %s19
      %p206 = scmp.lt.s32.totalorder %s19, 3
      %p207 = pnand %p205, %p206
      %p208 = pneg %p207
      // Predicated region
      $region37: #{tpu_custom_call.1} parent=5 // pred_check
        _
      $region38: #{tpu_custom_call.1} parent=5 // pred_check_branch
        %210 = sbr.rel (%p207) target = $region40
      $region39: #{tpu_custom_call.1} parent=5 // pred_region
        %s211 = ssub.s32 %s19, 1
        %s212 = sand.u32 %s32, 1
        %s213 = scalar_lea.sflag [#allocation4], %s212
        %s214 = sand.u32 %s32, 1
        %s215 = smul.addr %s214, 8
        %s216 = scalar_lea.vmem [#allocation3], %s215
        // Predicated region
        $region41: #{tpu_custom_call.1} parent=39 // pred_check
          %p217 = pneg %p45
        $region42: #{tpu_custom_call.1} parent=39 // pred_check_branch
          %219 = sbr.rel (%p217) target = $region44
        $region43: #{tpu_custom_call.1} parent=39 // pred_region
          %220 = dma.done %s213, 128
        $region44: #{tpu_custom_call.1} parent=39 // pred_fallthru
          _
        %s221 = sand.u32 %s32, 1
        %s222 = scalar_lea.sflag [#allocation4], %s221
        %s223 = sand.u32 %s32, 1
        %s224 = smul.addr %s223, 8
        %s225 = scalar_lea.vmem [#allocation3], %s224
        %p226 = pneg %p45
        %p227 = pneg %p42
        %p228 = pneg %p66
        %p229 = pneg %p63
        %p230 = pneg %p87
        %p231 = pneg %p84
        %p232 = pneg %p108
        %p233 = pneg %p105
        %p234 = pneg %p129
        %p235 = pneg %p126
        %p236 = pneg %p155
        %p237 = pneg %p152
        %s238 = sand.u32 %s142, 1
        %s239 = scalar_lea.sflag [#allocation5], %s238
        %s240 = sand.u32 %s142, 1
        %s241 = smul.addr %s240, 8
        %s242 = scalar_lea.vmem [#allocation6], %s241
        %v243 = vld [vmem:[%s216] sm:$0xff]
        %v245 = vcombine.high %v243, %v243
        %vm247 = vcmask 1043456
        %v248 = vsel %vm247, %v243, 0.0
        %v249 = vsel %vm247, %v245, 0.0
        %v250 = vadd.f32 %v248, %v249
        %251 = vadd.xlane.f32.xlu0 %v250
        %v252 = vpop.xlane.xlu0 %251
        %v253 = vmul.f32 %v252, 0.00390625
        %v254 = vld [vmem:[%s1] sm:$0xf]
        %v255 = vld [vmem:[#allocation2] sm:$0x1]
        %v257 = vlaneseq
        %v258 = vand.u32 %v257, 127
        %v259 = vlaneseq
        %v260 = vshrl.u32 %v259, 7
        %v261 = vsub.s32 %v258, %v260
        %v262 = vrot.slane %v253, %v261
        %vm263 = vcmask 31744
        %v264 = vsel %vm263, %v262, 0
        %v267 = vsel %vm247, %v254, 0
        %269 = vmatprep.subr.mxu0 0.0
        %270 = vmatpush1.msra.mxu0 %v267
        %271 = vmatprep.subr.mxu0 0.0
        %272 = vmatpush1.msra.mxu0 0.0
        %273 = vmatprep.subr.mxu0 0.0
        %274 = vmatpush1.msra.mxu0 0.0
        %275 = vmatprep.subr.mxu0 0.0
        %276 = vmatpush1.msra.mxu0 0.0
        %277 = vmatprep.subr.mxu0 0.0
        %278 = vmatpush1.msra.mxu0 0.0
        %279 = vmatprep.subr.mxu0 0.0
        %280 = vmatpush1.msra.mxu0 0.0
        %281 = vmatprep.subr.mxu0 0.0
        %282 = vmatpush1.msra.mxu0 0.0
        %283 = vmatprep.subr.mxu0 0.0
        %284 = vmatpush1.msra.mxu0 0.0
        %285 = vmatprep.subr.mxu0 0.0
        %286 = vmatpush1.msra.mxu0 0.0
        %287 = vmatprep.subr.mxu0 0.0
        %288 = vmatpush1.msra.mxu0 0.0
        %289 = vmatprep.subr.mxu0 0.0
        %290 = vmatpush1.msra.mxu0 0.0
        %291 = vmatprep.subr.mxu0 0.0
        %292 = vmatpush1.msra.mxu0 0.0
        %293 = vmatprep.subr.mxu0 0.0
        %294 = vmatpush1.msra.mxu0 0.0
        %295 = vmatprep.subr.mxu0 0.0
        %296 = vmatpush1.msra.mxu0 0.0
        %297 = vmatprep.subr.mxu0 0.0
        %298 = vmatpush1.msra.mxu0 0.0
        %299 = vmatprep.subr.mxu0 0.0
        %300 = vmatpush1.msra.mxu0 0.0
        %301 = vmatprep.subr.mxu0 0.0
        %302 = vmatpush1.msra.mxu0 0.0
        %303 = vmatprep.subr.mxu0 0.0
        %304 = vmatpush1.msra.mxu0 0.0
        %305 = vmatprep.subr.mxu0 0.0
        %306 = vmatpush1.msra.mxu0 0.0
        %307 = vmatprep.subr.mxu0 0.0
        %308 = vmatpush1.msra.mxu0 0.0
        %309 = vmatprep.subr.mxu0 0.0
        %310 = vmatpush1.msra.mxu0 0.0
        %311 = vmatprep.subr.mxu0 0.0
        %312 = vmatpush1.msra.mxu0 0.0
        %313 = vmatprep.subr.mxu0 0.0
        %314 = vmatpush1.msra.mxu0 0.0
        %315 = vmatprep.subr.mxu0 0.0
        %316 = vmatpush1.msra.mxu0 0.0
        %317 = vmatprep.subr.mxu0 0.0
        %318 = vmatpush1.msra.mxu0 0.0
        %319 = vmatprep.subr.mxu0 0.0
        %320 = vmatpush1.msra.mxu0 0.0
        %321 = vmatprep.subr.mxu0 0.0
        %322 = vmatpush1.msra.mxu0 0.0
        %323 = vmatprep.subr.mxu0 0.0
        %324 = vmatpush1.msra.mxu0 0.0
        %325 = vmatprep.subr.mxu0 0.0
        %326 = vmatpush1.msra.mxu0 0.0
        %327 = vmatprep.subr.mxu0 0.0
        %328 = vmatpush1.msra.mxu0 0.0
        %329 = vmatprep.subr.mxu0 0.0
        %330 = vmatpush1.msra.mxu0 0.0
        %331 = vmatprep.subr.mxu0 0.0
        %332 = vmatpush1.msra.mxu0 0.0
        %333 = vmatprep.mubr.f32.mxu0 0.0
        %334 = vmatmul.mubr.f32.gmra.mrb[0].mxu0 %v264
        %v335 = vpop.f32.mrb[0].mxu0
        %v336 = vadd.f32 %v255, %v335
        %v337 = vpop.f32.mrb[0].mxu0
        %338 = vdwg.mxu0
        %v339 = vmax.f32 %v336, 0.0
        %v340 = vld [vmem:[%s3] sm:$0x1]
        %v341 = vld [vmem:[%s4] sm:$0x1]
        %vm342 = vcmask 7168
        %v344 = vsel %vm342, %v339, 0
        %vm346 = vcmask 1040384
        %v348 = vsel %vm346, %v340, 0
        %350 = vmatprep.subr.mxu0 0.0
        %351 = vmatpush1.msra.mxu0 %v348
        %352 = vmatprep.subr.mxu0 0.0
        %353 = vmatpush1.msra.mxu0 0.0
        %354 = vmatprep.subr.mxu0 0.0
        %355 = vmatpush1.msra.mxu0 0.0
        %356 = vmatprep.subr.mxu0 0.0
        %357 = vmatpush1.msra.mxu0 0.0
        %358 = vmatprep.subr.mxu0 0.0
        %359 = vmatpush1.msra.mxu0 0.0
        %360 = vmatprep.subr.mxu0 0.0
        %361 = vmatpush1.msra.mxu0 0.0
        %362 = vmatprep.subr.mxu0 0.0
        %363 = vmatpush1.msra.mxu0 0.0
        %364 = vmatprep.subr.mxu0 0.0
        %365 = vmatpush1.msra.mxu0 0.0
        %366 = vmatprep.subr.mxu0 0.0
        %367 = vmatpush1.msra.mxu0 0.0
        %368 = vmatprep.subr.mxu0 0.0
        %369 = vmatpush1.msra.mxu0 0.0
        %370 = vmatprep.subr.mxu0 0.0
        %371 = vmatpush1.msra.mxu0 0.0
        %372 = vmatprep.subr.mxu0 0.0
        %373 = vmatpush1.msra.mxu0 0.0
        %374 = vmatprep.subr.mxu0 0.0
        %375 = vmatpush1.msra.mxu0 0.0
        %376 = vmatprep.subr.mxu0 0.0
        %377 = vmatpush1.msra.mxu0 0.0
        %378 = vmatprep.subr.mxu0 0.0
        %379 = vmatpush1.msra.mxu0 0.0
        %380 = vmatprep.subr.mxu0 0.0
        %381 = vmatpush1.msra.mxu0 0.0
        %382 = vmatprep.subr.mxu0 0.0
        %383 = vmatpush1.msra.mxu0 0.0
        %384 = vmatprep.subr.mxu0 0.0
        %385 = vmatpush1.msra.mxu0 0.0
        %386 = vmatprep.subr.mxu0 0.0
        %387 = vmatpush1.msra.mxu0 0.0
        %388 = vmatprep.subr.mxu0 0.0
        %389 = vmatpush1.msra.mxu0 0.0
        %390 = vmatprep.subr.mxu0 0.0
        %391 = vmatpush1.msra.mxu0 0.0
        %392 = vmatprep.subr.mxu0 0.0
        %393 = vmatpush1.msra.mxu0 0.0
        %394 = vmatprep.subr.mxu0 0.0
        %395 = vmatpush1.msra.mxu0 0.0
        %396 = vmatprep.subr.mxu0 0.0
        %397 = vmatpush1.msra.mxu0 0.0
        %398 = vmatprep.subr.mxu0 0.0
        %399 = vmatpush1.msra.mxu0 0.0
        %400 = vmatprep.subr.mxu0 0.0
        %401 = vmatpush1.msra.mxu0 0.0
        %402 = vmatprep.subr.mxu0 0.0
        %403 = vmatpush1.msra.mxu0 0.0
        %404 = vmatprep.subr.mxu0 0.0
        %405 = vmatpush1.msra.mxu0 0.0
        %406 = vmatprep.subr.mxu0 0.0
        %407 = vmatpush1.msra.mxu0 0.0
        %408 = vmatprep.subr.mxu0 0.0
        %409 = vmatpush1.msra.mxu0 0.0
        %410 = vmatprep.subr.mxu0 0.0
        %411 = vmatpush1.msra.mxu0 0.0
        %412 = vmatprep.subr.mxu0 0.0
        %413 = vmatpush1.msra.mxu0 0.0
        %414 = vmatprep.mubr.f32.mxu0 0.0
        %415 = vmatmul.mubr.f32.gmra.mrb[0].mxu0 %v344
        %v416 = vpop.f32.mrb[0].mxu0
        %v417 = vadd.f32 %v341, %v416
        %v418 = vpop.f32.mrb[0].mxu0
        %419 = vdwg.mxu0
        %v420 = vadd.f32 %v417, 3.0
        %v421 = vmul.f32 %v420, 0.16666667
        %v422 = vmax.f32 %v421, 0.0
        %v423 = vmin.f32 %v422, 1.0
        %v424 = vlaneseq
        %v425 = vshrl.u32 %v424, 7
        %v426 = vsub.s32 0, %v425
        %v427 = vrot.slane %v423, %v426
        %429 = vbcast.lane.b32.xlu0 %v427, 256
        %v430 = vpop.permute.xlu0 %429
        %v433 = vunpack.c.l.s4 839922192
        %v434 = vunpack.c.0.s8 %v433
        %v435 = vlaneseq
        %v436 = vshrl.u32 %v435, 7
        %v437 = vsub.s32 %v434, %v436
        %v438 = vrot.slane %v430, %v437
        %v440 = vmul.f32 %v243, %v438
        %441 = vst [vmem:[%s242] sm:$0xff] %v440
        %s442 = sand.u32 %s142, 1
        %s443 = scalar_lea.sflag [#allocation5], %s442
        %s444 = sand.u32 %s142, 1
        %s445 = smul.addr %s444, 8
        %s446 = scalar_lea.vmem [#allocation6], %s445
        // Predicated region
        $region45: #{tpu_custom_call.1} parent=39 // pred_check
          %p447 = pneg %p152
        $region46: #{tpu_custom_call.1} parent=39 // pred_check_branch
          %449 = sbr.rel (%p447) target = $region48
        $region47: #{tpu_custom_call.1} parent=39 // pred_region
          %s451 = ssub.s32 128, 128
          %452 = vsyncadd %s443, %s451
          %s453 = smul.addr %s24, 2
          %s454 = smul.addr %s453, 64
          %s455 = scalar_lea.hbm %s5, %s454
          %s457 = sshll.u32 %s446, 4
          %s458 = int_to_ptr.vmem [resolvable:$true] %s457
          %460 = dma.vmem_to_hbm [thread:$0]  %s458, 128, %s455, %s443
        $region48: #{tpu_custom_call.1} parent=39 // pred_fallthru
          _
      $region40: #{tpu_custom_call.1} parent=5 // pred_fallthru
        _
      %p461 = scmp.le.s32.totalorder 2, %s19
      // Predicated region
      $region49: #{tpu_custom_call.1} parent=5 // pred_check
        %p462 = pneg %p461
      $region50: #{tpu_custom_call.1} parent=5 // pred_check_branch
        %464 = sbr.rel (%p462) target = $region52
      $region51: #{tpu_custom_call.1} parent=5 // pred_region
        %s465 = ssub.s32 %s19, 2
        // Predicated region
        $region53: #{tpu_custom_call.1} parent=51 // pred_check
          %p466 = pneg %p158
        $region54: #{tpu_custom_call.1} parent=51 // pred_check_branch
          %468 = sbr.rel (%p466) target = $region56
        $region55: #{tpu_custom_call.1} parent=51 // pred_region
          %s469 = sand.u32 %s143, 1
          %s470 = scalar_lea.sflag [#allocation5], %s469
          %s471 = sand.u32 %s143, 1
          %s472 = smul.addr %s471, 8
          %s473 = scalar_lea.vmem [#allocation6], %s472
          %474 = dma.done %s470, 128
        $region56: #{tpu_custom_call.1} parent=51 // pred_fallthru
          _
      $region52: #{tpu_custom_call.1} parent=5 // pred_fallthru
        _
    $region6: #{tpu_custom_call.1} parent=1 // loop_footer
      %s23 = sadd.s32 1, %s19
    $region7: #{tpu_custom_call.1} parent=1 // loop_footer_branch
      %18 = sbr.rel target = $region3
    $region8: #{tpu_custom_call.1} parent=1 // loop_exit
      _
    %475 = vsyncpa [#allocation4], 1
    %s476 = scalar_lea.sflag [#allocation4], 1
    %477 = vsyncpa %s476, 1
    %478 = vsyncpa [#allocation5], 1
    %s479 = scalar_lea.sflag [#allocation5], 1
    %480 = vsyncpa %s479, 1

</llo_original>
